<compile_context>
chip_gen: v6e
topology: v6e:2x2x1
jax: 0.10.0
libtpu: 0.0.40
codegen_flags: <defaults>
</compile_context>

<pallas_src>
import functools

import jax
import jax.numpy as jnp
from jax import lax
from jax.experimental import pallas as pl
from jax.experimental.pallas import tpu as pltpu


_ROW_TILE_TARGET = 512


@functools.lru_cache(maxsize=1)
def _vmem_limit_bytes():
    """~75% of physical VMEM: 48 MiB on v7x (64 MiB parts), 96 MiB on v5e/v6e."""
    cap = 64 * 1024 * 1024
    try:
        info = pltpu.get_tpu_info()
        cap = int(getattr(info, "vmem_capacity_bytes", cap) or cap)
    except Exception:
        pass
    return min(cap * 3 // 4, 100 * 1024 * 1024)


def _row_tile(rows, min_steps=4):
    """Row tile: multiple of 8, <=512, small enough for >=min_steps grid steps
    (DMA/compute overlap + v7x 2-TC sharding); whole extent when rows are tiny."""
    if rows <= 8 * min_steps:
        return rows
    t = min(_ROW_TILE_TARGET, -(-rows // min_steps))
    return max(8, (t // 8) * 8)


def _heads_per_group(num_heads, head_dim, embed_dim):
    """Heads per attention grid step: pick g so the per-group lane width g*d is
    128-aligned (lane-dense blocks, more v7x parallel units); else all heads."""
    if embed_dim % 128 == 0 and head_dim <= 128 and 128 % head_dim == 0:
        g = 128 // head_dim
        if num_heads % g == 0:
            return g
    return num_heads


# ---------------------------------------------------------------------------
# Trace-time weight prep: zero-scatter a (C, C) weight into a head-interleaved
# (C, 2C) matrix so x @ W_sc lands directly in the per-head [content|pos] slot.
# This is pure jnp on tiny (C, C) tensors, done once per call (fused by XLA).
# ---------------------------------------------------------------------------
def _scatter_heads_w(w, num_heads, head_dim, slot):
    c_in, c_out = w.shape
    wr = w.reshape(c_in, num_heads, head_dim)
    z = jnp.zeros_like(wr)
    pair = (wr, z) if slot == 0 else (z, wr)
    return jnp.concatenate(pair, axis=-1).reshape(c_in, 2 * c_out)


def _scatter_heads_b(b, num_heads, head_dim, slot):
    br = b.reshape(num_heads, head_dim)
    z = jnp.zeros_like(br)
    pair = (br, z) if slot == 0 else (z, br)
    return jnp.concatenate(pair, axis=-1).reshape(2 * b.shape[0])


# ---------------------------------------------------------------------------
# Fused row-tiled projection kernels
#   activation inputs : (ts, B*C) f32 tiles (batch folded into lanes), cast to
#                       bf16 in-kernel right before the dot (single HBM pass)
#   outputs           : (B, ts, width) bf16 tiles of batch-leading slabs
# ---------------------------------------------------------------------------
def _q_proj_kernel(*refs, nb, c, add_pos):
    if add_pos:
        q_ref, qs_ref, qp_ref, wq_ref, wqs_ref, wqp_ref, b_ref, out_ref = refs
    else:
        q_ref, qs_ref, wq_ref, wqs_ref, b_ref, out_ref = refs
        qp_ref = wqp_ref = None
    wq = wq_ref[...]          # (C, 2C) bf16, head-interleaved content slots
    wqs = wqs_ref[...]        # (C, 2C) bf16, head-interleaved sine slots
    wqp = wqp_ref[...] if add_pos else None
    bias = b_ref[...]         # (1, 2C) f32, hoisted (loaded once per grid step)
    for b in range(nb):
        cols = slice(b * c, (b + 1) * c)
        y = jnp.dot(q_ref[:, cols].astype(wq.dtype), wq,
                    preferred_element_type=jnp.float32)
        y = y + jnp.dot(qs_ref[:, cols].astype(wqs.dtype), wqs,
                        preferred_element_type=jnp.float32)
        if add_pos:
            y = y + jnp.dot(qp_ref[:, cols].astype(wqp.dtype), wqp,
                            preferred_element_type=jnp.float32)
        out_ref[b] = (y + bias).astype(out_ref.dtype)


def _kv_proj_kernel(k_ref, kp_ref, v_ref, wk_ref, wkp_ref, wv_ref,
                    bk_ref, bv_ref, k_out_ref, v_out_ref, *, nb, c):
    wk, wkp, wv = wk_ref[...], wkp_ref[...], wv_ref[...]
    bk, bv = bk_ref[...], bv_ref[...]                 # hoisted bias loads
    for b in range(nb):
        cols = slice(b * c, (b + 1) * c)
        ki = jnp.dot(k_ref[:, cols].astype(wk.dtype), wk,
                     preferred_element_type=jnp.float32)
        ki = ki + jnp.dot(kp_ref[:, cols].astype(wkp.dtype), wkp,
                          preferred_element_type=jnp.float32)
        vv = jnp.dot(v_ref[:, cols].astype(wv.dtype), wv,
                     preferred_element_type=jnp.float32)
        k_out_ref[b] = (ki + bk).astype(k_out_ref.dtype)
        v_out_ref[b] = (vv + bv).astype(v_out_ref.dtype)


def _rowwise_proj(kernel_fn, xs, params, out_widths, rows, nb,
                  out_dtype=jnp.bfloat16):
    """Row-tiled fused projections: xs[(rows, nb*C) f32] -> [(nb, rows, w) bf16]."""
    ts = _row_tile(rows)
    bc = xs[0].shape[1]
    in_specs = ([pl.BlockSpec((ts, bc), lambda i: (i, 0)) for _ in xs] +
                [pl.BlockSpec(p.shape, lambda i: (0, 0)) for p in params])
    out_specs = [pl.BlockSpec((nb, ts, w), lambda i: (0, i, 0)) for w in out_widths]
    out_shape = [jax.ShapeDtypeStruct((nb, rows, w), out_dtype) for w in out_widths]
    return pl.pallas_call(
        kernel_fn,
        grid=(pl.cdiv(rows, ts),),
        in_specs=in_specs,
        out_specs=out_specs,
        out_shape=out_shape,
        compiler_params=pltpu.CompilerParams(
            dimension_semantics=("parallel",),
            vmem_limit_bytes=_vmem_limit_bytes()),
    )(*xs, *params)


# ---------------------------------------------------------------------------
# Attention: grid = (batch, head_group). Per head: ONE fused K=2d score matmul
# (q/k already head-interleaved), bf16 logits store, f32 softmax, P@V written
# straight into its static column slice of the lane-dense output block.
# ---------------------------------------------------------------------------
def _attn_kernel(q_ref, k_ref, v_ref, o_ref, logit_ref, *, heads, head_dim, scale):
    # q_ref: (N, g*2d)  k_ref: (HW, g*2d)  v_ref: (HW, g*d)   (all bf16)
    # o_ref: (N, g*d) bf16   logit_ref: (g, N, HW) bf16
    d = head_dim
    dn = (((1,), (1,)), ((), ()))   # contract last dims of both operands (no k.T)
    for h in range(heads):          # short static unroll (g <= 128/d); nothing is
        qh = q_ref[:, 2 * d * h: 2 * d * (h + 1)]       # carried across iterations
        kh = k_ref[:, 2 * d * h: 2 * d * (h + 1)]
        s = lax.dot_general(qh, kh, dn, preferred_element_type=jnp.float32) * scale
        logit_ref[h] = s.astype(logit_ref.dtype)        # bf16 logits (halved vst/HBM)
        m = jnp.max(s, axis=-1, keepdims=True)          # softmax kept in f32
        p = jnp.exp(s - m)
        denom = jnp.sum(p, axis=-1, keepdims=True)
        p = p * pl.reciprocal(denom, approx=True)       # EUP, off the VPU path
        pv = jnp.dot(p.astype(v_ref.dtype), v_ref[:, d * h: d * (h + 1)],
                     preferred_element_type=jnp.float32)
        o_ref[:, d * h: d * (h + 1)] = pv.astype(o_ref.dtype)


def _attention(q_int, k_int, v, *, num_heads, head_dim, scale, heads_per_group):
    B, N, _ = q_int.shape
    HW = k_int.shape[1]
    C = num_heads * head_dim
    g = heads_per_group
    ngrp = num_heads // g
    d = head_dim
    kernel = functools.partial(_attn_kernel, heads=g, head_dim=d, scale=scale)
    out, logits = pl.pallas_call(
        kernel,
        grid=(B, ngrp),
        in_specs=[
            pl.BlockSpec((None, N, g * 2 * d), lambda b, hg: (b, 0, hg)),
            pl.BlockSpec((None, HW, g * 2 * d), lambda b, hg: (b, 0, hg)),
            pl.BlockSpec((None, HW, g * d), lambda b, hg: (b, 0, hg)),
        ],
        out_specs=[
            pl.BlockSpec((None, N, g * d), lambda b, hg: (b, 0, hg)),
            pl.BlockSpec((None, g, N, HW), lambda b, hg: (b, hg, 0, 0)),
        ],
        out_shape=[
            jax.ShapeDtypeStruct((B, N, C), jnp.bfloat16),
            jax.ShapeDtypeStruct((B, num_heads, N, HW), jnp.bfloat16),
        ],
        compiler_params=pltpu.CompilerParams(
            dimension_semantics=("parallel", "parallel"),
            vmem_limit_bytes=_vmem_limit_bytes()),
    )(q_int, k_int, v)
    return out, logits


# ---------------------------------------------------------------------------
# Fused out_proj + residual: writes the final (N, B*C) lane-dense slab directly.
# ---------------------------------------------------------------------------
def _out_proj_kernel(x_ref, id_ref, w_ref, b_ref, o_ref, *, nb, c):
    w = w_ref[...]
    bias = b_ref[...]                                   # hoisted
    for b in range(nb):
        cols = slice(b * c, (b + 1) * c)
        y = jnp.dot(x_ref[b], w, preferred_element_type=jnp.float32) + bias
        o_ref[:, cols] = id_ref[:, cols] + y


def _out_proj_residual(attn_out, identity2d, w, b):
    B, N, C = attn_out.shape
    ts = _row_tile(N)
    kernel = functools.partial(_out_proj_kernel, nb=B, c=C)
    return pl.pallas_call(
        kernel,
        grid=(pl.cdiv(N, ts),),
        in_specs=[
            pl.BlockSpec((B, ts, C), lambda i: (0, i, 0)),
            pl.BlockSpec((ts, B * C), lambda i: (i, 0)),
            pl.BlockSpec(w.shape, lambda i: (0, 0)),
            pl.BlockSpec(b.shape, lambda i: (0, 0)),
        ],
        out_specs=pl.BlockSpec((ts, B * C), lambda i: (i, 0)),
        out_shape=jax.ShapeDtypeStruct((N, B * C), jnp.float32),
        compiler_params=pltpu.CompilerParams(
            dimension_semantics=("parallel",),
            vmem_limit_bytes=_vmem_limit_bytes()),
    )(attn_out, identity2d, w, b)


# ---------------------------------------------------------------------------
# Module logic (glue in plain JAX, hot paths in the Pallas kernels above)
# ---------------------------------------------------------------------------
def init_params(key, embed_dim):
    """Deterministic init matching nn.Linear shapes (weights stored as (in, out))."""
    names = ["query_content", "query_pos", "query_pos_sine", "key_content",
             "key_pos", "value", "out"]
    params = {}
    bound = 1.0 / (embed_dim ** 0.5)
    k = key
    for n in names:
        k, kw, kb = jax.random.split(k, 3)
        params[n + "_w"] = jax.random.uniform(
            kw, (embed_dim, embed_dim), jnp.float32, -bound, bound)
        params[n + "_b"] = jax.random.uniform(
            kb, (embed_dim,), jnp.float32, -bound, bound)
    return params


def ks_conditional_cross_attention_forward(
        params, num_heads, query, key=None, value=None, *, identity=None,
        query_pos=None, key_pos=None, query_sine_embed=None,
        is_first_layer=False, batch_first=False):
    # TODO(synk): attn_mask / key_padding_mask are not modeled; attn_drop /
    # proj_drop default to 0.0 so the dropouts are identities and are omitted.
    if key is None:
        key = query
    if value is None:
        value = key
    if identity is None:
        identity = query
    if key_pos is None and query_pos is not None and query_pos.shape == key.shape:
        key_pos = query_pos
    assert query_pos is not None and key_pos is not None

    if batch_first:
        query, key, value = (jnp.swapaxes(t, 0, 1) for t in (query, key, value))
        query_pos, key_pos, identity = (
            jnp.swapaxes(t, 0, 1) for t in (query_pos, key_pos, identity))
        query_sine_embed = jnp.swapaxes(query_sine_embed, 0, 1)

    N, B, C = query.shape
    HW = key.shape[0]
    H = num_heads
    assert C % H == 0
    d = C // H
    cd = jnp.bfloat16
    add_pos = bool(is_first_layer)

    # Fold batch into the lane axis (free reshape); activations stay f32 — the
    # bf16 cast happens inside the projection kernels (single HBM pass).
    q2 = query.reshape(N, B * C)
    qs2 = query_sine_embed.reshape(N, B * C)
    k2 = key.reshape(HW, B * C)
    kp2 = key_pos.reshape(HW, B * C)
    v2 = value.reshape(HW, B * C)

    def w_(n):
        return params[n + "_w"].astype(jnp.float32)

    def b_(n):
        return params[n + "_b"].astype(jnp.float32)

    # Head-interleaved (C, 2C) projection weights: even slot = content, odd = pos.
    wq_sc = _scatter_heads_w(w_("query_content"), H, d, 0)
    wqs_sc = _scatter_heads_w(w_("query_pos_sine"), H, d, 1)
    bq_int = (_scatter_heads_b(b_("query_content"), H, d, 0)
              + _scatter_heads_b(b_("query_pos_sine"), H, d, 1))
    q_xs = [q2, qs2]
    q_ws = [wq_sc.astype(cd), wqs_sc.astype(cd)]
    if add_pos:
        wqp_sc = _scatter_heads_w(w_("query_pos"), H, d, 0)
        bq_int = bq_int + _scatter_heads_b(b_("query_pos"), H, d, 0)
        q_xs = [q2, qs2, query_pos.reshape(N, B * C)]
        q_ws = [wq_sc.astype(cd), wqs_sc.astype(cd), wqp_sc.astype(cd)]
    q_params = q_ws + [bq_int.reshape(1, 2 * C)]

    wk_sc = _scatter_heads_w(w_("key_content"), H, d, 0)
    wkp_comb = _scatter_heads_w(w_("key_pos"), H, d, 1)
    bk_int = (_scatter_heads_b(b_("key_content"), H, d, 0)
              + _scatter_heads_b(b_("key_pos"), H, d, 1))
    if add_pos:  # first layer: key content slot also gets +key_pos projection
        wkp_comb = wkp_comb + _scatter_heads_w(w_("key_pos"), H, d, 0)
        bk_int = bk_int + _scatter_heads_b(b_("key_pos"), H, d, 0)
    kv_params = [wk_sc.astype(cd), wkp_comb.astype(cd), w_("value").astype(cd),
                 bk_int.reshape(1, 2 * C), b_("value").reshape(1, C)]

    # Projections (q path skips query_pos entirely on non-first layers).
    (q_int,) = _rowwise_proj(
        functools.partial(_q_proj_kernel, nb=B, c=C, add_pos=add_pos),
        q_xs, q_params, out_widths=[2 * C], rows=N, nb=B)
    k_int, v_proj = _rowwise_proj(
        functools.partial(_kv_proj_kernel, nb=B, c=C),
        [k2, kp2, v2], kv_params, out_widths=[2 * C, C], rows=HW, nb=B)

    # Attention (fused K=2d score matmuls, bf16 logits, lane-dense output).
    g = _heads_per_group(H, d, C)
    scale = float(2 * d) ** -0.5
    attn_out, attn_logits = _attention(
        q_int, k_int, v_proj, num_heads=H, head_dim=d, scale=scale,
        heads_per_group=g)

    # out_proj + residual, fused, lane-dense (N, B*C) output.
    ident2d = identity.reshape(N, B * C).astype(jnp.float32)
    out2d = _out_proj_residual(attn_out, ident2d,
                               w_("out").astype(cd), b_("out").reshape(1, C))
    out = out2d.reshape(N, B, C)
    if batch_first:
        out = jnp.swapaxes(out, 0, 1)
    # NOTE: ca_attn_map_logits are the scaled pre-softmax logits, stored as bf16.
    return [out], {"ca_attn_map_logits": attn_logits}


# ---------------------------------------------------------------------------
if __name__ == "__main__":
    embed_dim, num_heads = 32, 4
    N, B, HW = 8, 2, 16

    root = jax.random.PRNGKey(0)
    kq, kk, kv, kqp, kkp, ksin, kp = jax.random.split(root, 7)
    query = jax.random.normal(kq, (N, B, embed_dim), jnp.float32)
    key = jax.random.normal(kk, (HW, B, embed_dim), jnp.float32)
    value = jax.random.normal(kv, (HW, B, embed_dim), jnp.float32)
    query_pos = jax.random.normal(kqp, (N, B, embed_dim), jnp.float32)
    key_pos = jax.random.normal(kkp, (HW, B, embed_dim), jnp.float32)
    query_sine_embed = jax.random.normal(ksin, (N, B, embed_dim), jnp.float32)

    params = init_params(kp, embed_dim)

    # First-layer path (adds query_pos / key_pos to the content projections).
    out_list, aux = ks_conditional_cross_attention_forward(
        params, num_heads, query, key, value,
        query_pos=query_pos, key_pos=key_pos,
        query_sine_embed=query_sine_embed, is_first_layer=True)
    out = out_list[0]
    logits = aux["ca_attn_map_logits"]
    jax.block_until_ready((out, logits))
    assert out.shape == (N, B, embed_dim)
    assert out.dtype == jnp.float32
    assert logits.shape == (B, num_heads, N, HW)
    assert logits.dtype == jnp.bfloat16

    # Non-first-layer path (query_pos not consumed, separate kernel variant).
    out_list2, aux2 = ks_conditional_cross_attention_forward(
        params, num_heads, query, key, value,
        query_pos=query_pos, key_pos=key_pos,
        query_sine_embed=query_sine_embed, is_first_layer=False)
    jax.block_until_ready((out_list2[0], aux2["ca_attn_map_logits"]))
    assert out_list2[0].shape == (N, B, embed_dim)

    print("KERNEL_OK")
</pallas_src>

<mosaic_0001>
module attributes {stable_mosaic.version = 11 : i64} {
  func.func @_q_proj_kernel(%arg0: i32, %arg1: memref<8x64xf32, #tpu.memory_space<vmem>>, %arg2: memref<8x64xf32, #tpu.memory_space<vmem>>, %arg3: memref<8x64xf32, #tpu.memory_space<vmem>>, %arg4: memref<32x64xbf16, #tpu.memory_space<vmem>>, %arg5: memref<32x64xbf16, #tpu.memory_space<vmem>>, %arg6: memref<32x64xbf16, #tpu.memory_space<vmem>>, %arg7: memref<1x64xf32, #tpu.memory_space<vmem>>, %arg8: memref<2x8x64xbf16, #tpu.memory_space<vmem>>) attributes {dimension_semantics = [#tpu.dimension_semantics<parallel>], iteration_bounds = array<i64: 1>, scalar_prefetch = 0 : i64, scratch_operands = 0 : i64, tpu.core_type = #tpu.core_type<tc>, window_params = [{transform_indices = @transform_0, window_bounds = array<i64: 8, 64>}, {transform_indices = @transform_1, window_bounds = array<i64: 8, 64>}, {transform_indices = @transform_2, window_bounds = array<i64: 8, 64>}, {pipeline_mode = #tpu.pipeline_mode<synchronous>, transform_indices = @transform_3, window_bounds = array<i64: 32, 64>}, {pipeline_mode = #tpu.pipeline_mode<synchronous>, transform_indices = @transform_4, window_bounds = array<i64: 32, 64>}, {pipeline_mode = #tpu.pipeline_mode<synchronous>, transform_indices = @transform_5, window_bounds = array<i64: 32, 64>}, {pipeline_mode = #tpu.pipeline_mode<synchronous>, transform_indices = @transform_6, window_bounds = array<i64: 1, 64>}, {transform_indices = @transform_7, window_bounds = array<i64: 2, 8, 64>}]} {
    %c0 = arith.constant 0 : index
    %c0_0 = arith.constant 0 : index
    %0 = vector.load %arg4[%c0, %c0_0] : memref<32x64xbf16, #tpu.memory_space<vmem>>, vector<32x64xbf16>
    %c0_1 = arith.constant 0 : index
    %c0_2 = arith.constant 0 : index
    %1 = vector.load %arg5[%c0_1, %c0_2] : memref<32x64xbf16, #tpu.memory_space<vmem>>, vector<32x64xbf16>
    %c0_3 = arith.constant 0 : index
    %c0_4 = arith.constant 0 : index
    %2 = vector.load %arg6[%c0_3, %c0_4] : memref<32x64xbf16, #tpu.memory_space<vmem>>, vector<32x64xbf16>
    %c0_5 = arith.constant 0 : index
    %c0_6 = arith.constant 0 : index
    %3 = vector.load %arg7[%c0_5, %c0_6] : memref<1x64xf32, #tpu.memory_space<vmem>>, vector<1x64xf32>
    %c0_7 = arith.constant 0 : index
    %c0_8 = arith.constant 0 : index
    %4 = vector.load %arg1[%c0_7, %c0_8] : memref<8x64xf32, #tpu.memory_space<vmem>>, vector<8x32xf32>
    %5 = arith.truncf %4 : vector<8x32xf32> to vector<8x32xbf16>
    %cst = arith.constant dense<0.000000e+00> : vector<8x64xf32>
    %6 = tpu.matmul %5, %0, %cst {dimension_numbers = #tpu.dot_dimension_numbers<[1], [0], [0], [1], [0, 0, 1, 1], [], []>} : vector<8x32xbf16>, vector<32x64xbf16>, vector<8x64xf32> -> vector<8x64xf32>
    %c0_9 = arith.constant 0 : index
    %c0_10 = arith.constant 0 : index
    %7 = vector.load %arg2[%c0_9, %c0_10] : memref<8x64xf32, #tpu.memory_space<vmem>>, vector<8x32xf32>
    %8 = arith.truncf %7 : vector<8x32xf32> to vector<8x32xbf16>
    %cst_11 = arith.constant dense<0.000000e+00> : vector<8x64xf32>
    %9 = tpu.matmul %8, %1, %cst_11 {dimension_numbers = #tpu.dot_dimension_numbers<[1], [0], [0], [1], [0, 0, 1, 1], [], []>} : vector<8x32xbf16>, vector<32x64xbf16>, vector<8x64xf32> -> vector<8x64xf32>
    %10 = arith.addf %6, %9 : vector<8x64xf32>
    %c0_12 = arith.constant 0 : index
    %c0_13 = arith.constant 0 : index
    %11 = vector.load %arg3[%c0_12, %c0_13] : memref<8x64xf32, #tpu.memory_space<vmem>>, vector<8x32xf32>
    %12 = arith.truncf %11 : vector<8x32xf32> to vector<8x32xbf16>
    %cst_14 = arith.constant dense<0.000000e+00> : vector<8x64xf32>
    %13 = tpu.matmul %12, %2, %cst_14 {dimension_numbers = #tpu.dot_dimension_numbers<[1], [0], [0], [1], [0, 0, 1, 1], [], []>} : vector<8x32xbf16>, vector<32x64xbf16>, vector<8x64xf32> -> vector<8x64xf32>
    %14 = arith.addf %10, %13 : vector<8x64xf32>
    %15 = vector.broadcast %3 : vector<1x64xf32> to vector<8x64xf32>
    %16 = arith.addf %14, %15 : vector<8x64xf32>
    %17 = arith.truncf %16 : vector<8x64xf32> to vector<8x64xbf16>
    %c0_15 = arith.constant 0 : index
    %c0_16 = arith.constant 0 : index
    %c0_17 = arith.constant 0 : index
    %18 = vector.load %arg8[%c0_15, %c0_16, %c0_17] : memref<2x8x64xbf16, #tpu.memory_space<vmem>>, vector<1x8x64xbf16>
    %19 = vector.shape_cast %18 : vector<1x8x64xbf16> to vector<8x64xbf16>
    %20 = vector.shape_cast %17 : vector<8x64xbf16> to vector<1x8x64xbf16>
    tpu.vector_store %arg8[%c0_15, %c0_16, %c0_17], %20 {strides = array<i32>} : memref<2x8x64xbf16, #tpu.memory_space<vmem>>, vector<1x8x64xbf16>,
    %c0_18 = arith.constant 0 : index
    %c32 = arith.constant 32 : index
    %21 = vector.load %arg1[%c0_18, %c32] : memref<8x64xf32, #tpu.memory_space<vmem>>, vector<8x32xf32>
    %22 = arith.truncf %21 : vector<8x32xf32> to vector<8x32xbf16>
    %cst_19 = arith.constant dense<0.000000e+00> : vector<8x64xf32>
    %23 = tpu.matmul %22, %0, %cst_19 {dimension_numbers = #tpu.dot_dimension_numbers<[1], [0], [0], [1], [0, 0, 1, 1], [], []>} : vector<8x32xbf16>, vector<32x64xbf16>, vector<8x64xf32> -> vector<8x64xf32>
    %c0_20 = arith.constant 0 : index
    %c32_21 = arith.constant 32 : index
    %24 = vector.load %arg2[%c0_20, %c32_21] : memref<8x64xf32, #tpu.memory_space<vmem>>, vector<8x32xf32>
    %25 = arith.truncf %24 : vector<8x32xf32> to vector<8x32xbf16>
    %cst_22 = arith.constant dense<0.000000e+00> : vector<8x64xf32>
    %26 = tpu.matmul %25, %1, %cst_22 {dimension_numbers = #tpu.dot_dimension_numbers<[1], [0], [0], [1], [0, 0, 1, 1], [], []>} : vector<8x32xbf16>, vector<32x64xbf16>, vector<8x64xf32> -> vector<8x64xf32>
    %27 = arith.addf %23, %26 : vector<8x64xf32>
    %c0_23 = arith.constant 0 : index
    %c32_24 = arith.constant 32 : index
    %28 = vector.load %arg3[%c0_23, %c32_24] : memref<8x64xf32, #tpu.memory_space<vmem>>, vector<8x32xf32>
    %29 = arith.truncf %28 : vector<8x32xf32> to vector<8x32xbf16>
    %cst_25 = arith.constant dense<0.000000e+00> : vector<8x64xf32>
    %30 = tpu.matmul %29, %2, %cst_25 {dimension_numbers = #tpu.dot_dimension_numbers<[1], [0], [0], [1], [0, 0, 1, 1], [], []>} : vector<8x32xbf16>, vector<32x64xbf16>, vector<8x64xf32> -> vector<8x64xf32>
    %31 = arith.addf %27, %30 : vector<8x64xf32>
    %32 = vector.broadcast %3 : vector<1x64xf32> to vector<8x64xf32>
    %33 = arith.addf %31, %32 : vector<8x64xf32>
    %34 = arith.truncf %33 : vector<8x64xf32> to vector<8x64xbf16>
    %c1 = arith.constant 1 : index
    %c0_26 = arith.constant 0 : index
    %c0_27 = arith.constant 0 : index
    %35 = vector.load %arg8[%c1, %c0_26, %c0_27] : memref<2x8x64xbf16, #tpu.memory_space<vmem>>, vector<1x8x64xbf16>
    %36 = vector.shape_cast %35 : vector<1x8x64xbf16> to vector<8x64xbf16>
    %37 = vector.shape_cast %34 : vector<8x64xbf16> to vector<1x8x64xbf16>
    tpu.vector_store %arg8[%c1, %c0_26, %c0_27], %37 {strides = array<i32>} : memref<2x8x64xbf16, #tpu.memory_space<vmem>>, vector<1x8x64xbf16>,
    return
  }
  func.func @transform_0(%arg0: i32) -> (i32, i32) {
    %c0_i32 = arith.constant 0 : i32
    %c0_i32_0 = arith.constant 0 : i32
    return %arg0, %c0_i32 : i32, i32
  }
  func.func @transform_1(%arg0: i32) -> (i32, i32) {
    %c0_i32 = arith.constant 0 : i32
    %c0_i32_0 = arith.constant 0 : i32
    return %arg0, %c0_i32 : i32, i32
  }
  func.func @transform_2(%arg0: i32) -> (i32, i32) {
    %c0_i32 = arith.constant 0 : i32
    %c0_i32_0 = arith.constant 0 : i32
    return %arg0, %c0_i32 : i32, i32
  }
  func.func @transform_3(%arg0: i32) -> (i32, i32) {
    %c0_i32 = arith.constant 0 : i32
    %c0_i32_0 = arith.constant 0 : i32
    %c0_i32_1 = arith.constant 0 : i32
    return %c0_i32, %c0_i32_0 : i32, i32
  }
  func.func @transform_4(%arg0: i32) -> (i32, i32) {
    %c0_i32 = arith.constant 0 : i32
    %c0_i32_0 = arith.constant 0 : i32
    %c0_i32_1 = arith.constant 0 : i32
    return %c0_i32, %c0_i32_0 : i32, i32
  }
  func.func @transform_5(%arg0: i32) -> (i32, i32) {
    %c0_i32 = arith.constant 0 : i32
    %c0_i32_0 = arith.constant 0 : i32
    %c0_i32_1 = arith.constant 0 : i32
    return %c0_i32, %c0_i32_0 : i32, i32
  }
  func.func @transform_6(%arg0: i32) -> (i32, i32) {
    %c0_i32 = arith.constant 0 : i32
    %c0_i32_0 = arith.constant 0 : i32
    %c0_i32_1 = arith.constant 0 : i32
    return %c0_i32, %c0_i32_0 : i32, i32
  }
  func.func @transform_7(%arg0: i32) -> (i32, i32, i32) {
    %c0_i32 = arith.constant 0 : i32
    %c0_i32_0 = arith.constant 0 : i32
    %c0_i32_1 = arith.constant 0 : i32
    return %c0_i32, %arg0, %c0_i32_0 : i32, i32, i32
  }
}

</mosaic_0001>

<llo_original>
// kernel: tpu_custom_call.1
$region0: #{tpu_custom_call.1}
  #allocation0 [shape = 'u32[]', space=smem, size = 0x4, offset = 0x4, fixed_abs, tag = 'smem constant byte address 0x4 - core index']
  #allocation1 [shape = 'u32[144,128]{1,0:T(1,128)}', space=vmem, size = 0x12000, scoped, tag = 'internal scratch']
  %s0 = inlined_call_operand.hbm [shape: f32[8,64], index: 0, kind: input, shape index: {}]
  %s1 = inlined_call_operand.hbm [shape: f32[8,64], index: 1, kind: input, shape index: {}]
  %s2 = inlined_call_operand.hbm [shape: f32[8,64], index: 2, kind: input, shape index: {}]
  %s3 = inlined_call_operand.hbm [shape: bf16[32,64], index: 3, kind: input, shape index: {}]
  %s4 = inlined_call_operand.hbm [shape: bf16[32,64], index: 4, kind: input, shape index: {}]
  %s5 = inlined_call_operand.hbm [shape: bf16[32,64], index: 5, kind: input, shape index: {}]
  %s6 = inlined_call_operand.vmem [shape: f32[1,64], index: 6, kind: input, shape index: {}]
  %s7 = inlined_call_operand.hbm [shape: bf16[2,8,64], index: 7, kind: output, shape index: {}]
  %s8 = sld [smem:[#allocation0]]
  $region62: #{tpu_custom_call.1} parent=0
    _
  %s10 = ssub.s32 1, %s8
  %s11 = scalar_select 0, %s10, %s8
  $region1: #{tpu_custom_call.1} parent=0
    #allocation2 [shape = 'u8[4096]{0}', space=vmem, size = 0x1000, scoped, tag = 'input window, operand 0, single buffered']
    #allocation3 [shape = 's32[1]{0}', space=sflag, size = 0x4, scoped, tag = 'scoped memory for tpu_custom_call.1']
    #allocation4 [shape = 's32[1]{0}', space=sflag, size = 0x4, scoped, tag = 'scoped memory for tpu_custom_call.1']
    #allocation5 [shape = 'u8[4096]{0}', space=vmem, size = 0x1000, scoped, tag = 'input window, operand 1, single buffered']
    #allocation6 [shape = 's32[1]{0}', space=sflag, size = 0x4, scoped, tag = 'scoped memory for tpu_custom_call.1']
    #allocation7 [shape = 'u8[4096]{0}', space=vmem, size = 0x1000, scoped, tag = 'input window, operand 2, single buffered']
    #allocation8 [shape = 'u8[8192]{0}', space=vmem, size = 0x2000, scoped, tag = 'input window, operand 3, single buffered']
    #allocation9 [shape = 's32[1]{0}', space=sflag, size = 0x4, scoped, tag = 'scoped memory for tpu_custom_call.1']
    #allocation10 [shape = 'u8[8192]{0}', space=vmem, size = 0x2000, scoped, tag = 'input window, operand 4, single buffered']
    #allocation11 [shape = 'u8[8192]{0}', space=vmem, size = 0x2000, scoped, tag = 'input window, operand 5, single buffered']
    #allocation12 [shape = 's32[1]{0}', space=sflag, size = 0x4, scoped, tag = 'scoped memory for tpu_custom_call.1']
    #allocation13 [shape = 'u8[4096]{0}', space=vmem, size = 0x1000, scoped, tag = 'output window, operand 0, single buffered']
    %12 = vsyncpa [#allocation3], 0
    %13 = vsyncpa [#allocation6], 0
    %14 = vsyncpa [#allocation9], 0
    %15 = vsyncpa [#allocation12], 0
    %16 = vsyncpa [#allocation4], 0
    // Predicated region
    $region2: #{tpu_custom_call.1} parent=1 // pred_check
      _
    $region3: #{tpu_custom_call.1} parent=1 // pred_check_branch
      %18 = sbr.rel (0) target = $region5
    $region4: #{tpu_custom_call.1} parent=1 // pred_region
      %s20 = ssub.s32 128, 128
      %21 = vsyncadd [#allocation3], %s20
      %s23 = sshll.u32 [#allocation2], 4
      %s24 = int_to_ptr.vmem [resolvable:$true] %s23
      %26 = dma.hbm_to_vmem [thread:$0]  %s0, 128, %s24, [#allocation3]
    $region5: #{tpu_custom_call.1} parent=1 // pred_fallthru
      _
    // Predicated region
    $region6: #{tpu_custom_call.1} parent=1 // pred_check
      _
    $region7: #{tpu_custom_call.1} parent=1 // pred_check_branch
      %28 = sbr.rel (0) target = $region9
    $region8: #{tpu_custom_call.1} parent=1 // pred_region
      %s30 = ssub.s32 128, 128
      %31 = vsyncadd [#allocation6], %s30
      %s33 = sshll.u32 [#allocation5], 4
      %s34 = int_to_ptr.vmem [resolvable:$true] %s33
      %36 = dma.hbm_to_vmem [thread:$0]  %s1, 128, %s34, [#allocation6]
    $region9: #{tpu_custom_call.1} parent=1 // pred_fallthru
      _
    // Predicated region
    $region10: #{tpu_custom_call.1} parent=1 // pred_check
      _
    $region11: #{tpu_custom_call.1} parent=1 // pred_check_branch
      %38 = sbr.rel (0) target = $region13
    $region12: #{tpu_custom_call.1} parent=1 // pred_region
      %s40 = ssub.s32 128, 128
      %41 = vsyncadd [#allocation6], %s40
      %s43 = sshll.u32 [#allocation7], 4
      %s44 = int_to_ptr.vmem [resolvable:$true] %s43
      %46 = dma.hbm_to_vmem [thread:$0]  %s2, 128, %s44, [#allocation6]
    $region13: #{tpu_custom_call.1} parent=1 // pred_fallthru
      _
    // Predicated region
    $region14: #{tpu_custom_call.1} parent=1 // pred_check
      _
    $region15: #{tpu_custom_call.1} parent=1 // pred_check_branch
      %48 = sbr.rel (0) target = $region17
    $region16: #{tpu_custom_call.1} parent=1 // pred_region
      %s50 = ssub.s32 256, 256
      %51 = vsyncadd [#allocation9], %s50
      %s52 = sshll.u32 [#allocation8], 4
      %s53 = int_to_ptr.vmem [resolvable:$true] %s52
      %58 = dma.hbm_to_vmem [thread:$0]  %s3, 256, %s53, [#allocation9], 64, 64, 4
    $region17: #{tpu_custom_call.1} parent=1 // pred_fallthru
      _
    // Predicated region
    $region18: #{tpu_custom_call.1} parent=1 // pred_check
      _
    $region19: #{tpu_custom_call.1} parent=1 // pred_check_branch
      %60 = sbr.rel (0) target = $region21
    $region20: #{tpu_custom_call.1} parent=1 // pred_region
      %s62 = ssub.s32 256, 256
      %63 = vsyncadd [#allocation9], %s62
      %s64 = sshll.u32 [#allocation10], 4
      %s65 = int_to_ptr.vmem [resolvable:$true] %s64
      %70 = dma.hbm_to_vmem [thread:$0]  %s4, 256, %s65, [#allocation9], 64, 64, 4
    $region21: #{tpu_custom_call.1} parent=1 // pred_fallthru
      _
    // Predicated region
    $region22: #{tpu_custom_call.1} parent=1 // pred_check
      _
    $region23: #{tpu_custom_call.1} parent=1 // pred_check_branch
      %72 = sbr.rel (0) target = $region25
    $region24: #{tpu_custom_call.1} parent=1 // pred_region
      %s74 = ssub.s32 256, 256
      %75 = vsyncadd [#allocation12], %s74
      %s76 = sshll.u32 [#allocation11], 4
      %s77 = int_to_ptr.vmem [resolvable:$true] %s76
      %82 = dma.hbm_to_vmem [thread:$0]  %s5, 256, %s77, [#allocation12], 64, 64, 4
    $region25: #{tpu_custom_call.1} parent=1 // pred_fallthru
      _
    // Predicated region
    $region26: #{tpu_custom_call.1} parent=1 // pred_check
      _
    $region27: #{tpu_custom_call.1} parent=1 // pred_check_branch
      %84 = sbr.rel (0) target = $region29
    $region28: #{tpu_custom_call.1} parent=1 // pred_region
      _
    $region29: #{tpu_custom_call.1} parent=1 // pred_fallthru
      _
    // Predicated region
    $region30: #{tpu_custom_call.1} parent=1 // pred_check
      _
    $region31: #{tpu_custom_call.1} parent=1 // pred_check_branch
      %86 = sbr.rel (0) target = $region33
    $region32: #{tpu_custom_call.1} parent=1 // pred_region
      %87 = dma.done [#allocation3], 128
    $region33: #{tpu_custom_call.1} parent=1 // pred_fallthru
      _
    // Predicated region
    $region34: #{tpu_custom_call.1} parent=1 // pred_check
      _
    $region35: #{tpu_custom_call.1} parent=1 // pred_check_branch
      %89 = sbr.rel (0) target = $region37
    $region36: #{tpu_custom_call.1} parent=1 // pred_region
      %90 = dma.done [#allocation6], 128
    $region37: #{tpu_custom_call.1} parent=1 // pred_fallthru
      _
    // Predicated region
    $region38: #{tpu_custom_call.1} parent=1 // pred_check
      _
    $region39: #{tpu_custom_call.1} parent=1 // pred_check_branch
      %92 = sbr.rel (0) target = $region41
    $region40: #{tpu_custom_call.1} parent=1 // pred_region
      %93 = dma.done [#allocation6], 128
    $region41: #{tpu_custom_call.1} parent=1 // pred_fallthru
      _
    // Predicated region
    $region42: #{tpu_custom_call.1} parent=1 // pred_check
      _
    $region43: #{tpu_custom_call.1} parent=1 // pred_check_branch
      %95 = sbr.rel (0) target = $region45
    $region44: #{tpu_custom_call.1} parent=1 // pred_region
      %96 = dma.done [#allocation9], 256
    $region45: #{tpu_custom_call.1} parent=1 // pred_fallthru
      _
    // Predicated region
    $region46: #{tpu_custom_call.1} parent=1 // pred_check
      _
    $region47: #{tpu_custom_call.1} parent=1 // pred_check_branch
      %98 = sbr.rel (0) target = $region49
    $region48: #{tpu_custom_call.1} parent=1 // pred_region
      %99 = dma.done [#allocation9], 256
    $region49: #{tpu_custom_call.1} parent=1 // pred_fallthru
      _
    // Predicated region
    $region50: #{tpu_custom_call.1} parent=1 // pred_check
      _
    $region51: #{tpu_custom_call.1} parent=1 // pred_check_branch
      %101 = sbr.rel (0) target = $region53
    $region52: #{tpu_custom_call.1} parent=1 // pred_region
      %102 = dma.done [#allocation12], 256
    $region53: #{tpu_custom_call.1} parent=1 // pred_fallthru
      _
    %v104 = vld [vmem:[#allocation8] sm:$0xf]
    %v105 = vld [vmem:[#allocation8 + $0x4] sm:$0xf]
    %v106 = vld [vmem:[#allocation8 + $0x8] sm:$0xf]
    %v107 = vld [vmem:[#allocation8 + $0xc] sm:$0xf]
    %v108 = vld [vmem:[#allocation10] sm:$0xf]
    %v109 = vld [vmem:[#allocation10 + $0x4] sm:$0xf]
    %v110 = vld [vmem:[#allocation10 + $0x8] sm:$0xf]
    %v111 = vld [vmem:[#allocation10 + $0xc] sm:$0xf]
    %v112 = vld [vmem:[#allocation11] sm:$0xf]
    %v113 = vld [vmem:[#allocation11 + $0x4] sm:$0xf]
    %v114 = vld [vmem:[#allocation11 + $0x8] sm:$0xf]
    %v115 = vld [vmem:[#allocation11 + $0xc] sm:$0xf]
    %v116 = vld [vmem:[%s6] sm:$0x1]
    %v117 = vld [vmem:[#allocation2] sm:$0xff]
    %v118 = vpack.c.bf16 %v117, %v117
    %v119 = vld [vmem:[#allocation5] sm:$0xff]
    %v120 = vpack.c.bf16 %v119, %v119
    %v125 = vunpack.c.l.b16 %v108
    %v126 = vunpack.c.l.b16 %v109
    %v127 = vunpack.c.l.b16 %v110
    %v128 = vunpack.c.l.b16 %v111
    %v129 = vpack.c.b16 %v126, %v125
    %v130 = vpack.c.b16 %v128, %v127
    %vm133 = vcmask 261120
    %v135 = vsel %vm133, %v120, 0
    %137 = vmatprep.subr.bf16.mxu0 0
    %138 = vmatpush1.bf16.msra.mxu0 0
    %139 = vmatprep.subr.bf16.mxu0 0
    %140 = vmatpush1.bf16.msra.mxu0 0
    %141 = vmatprep.subr.bf16.mxu0 0
    %142 = vmatpush1.bf16.msra.mxu0 0
    %143 = vmatprep.subr.bf16.mxu0 0
    %144 = vmatpush1.bf16.msra.mxu0 0
    %145 = vmatprep.subr.bf16.mxu0 0
    %146 = vmatpush1.bf16.msra.mxu0 0
    %147 = vmatprep.subr.bf16.mxu0 0
    %148 = vmatpush1.bf16.msra.mxu0 0
    %149 = vmatprep.subr.bf16.mxu0 0
    %150 = vmatpush1.bf16.msra.mxu0 %v130
    %151 = vmatprep.subr.bf16.mxu0 0
    %152 = vmatpush1.bf16.msra.mxu0 %v129
    %153 = vmatprep.subr.bf16.mxu0 0
    %154 = vmatpush2.bf16.msra.mxu0 0
    %155 = vmatprep.subr.bf16.mxu0 0
    %156 = vmatpush2.bf16.msra.mxu0 0
    %157 = vmatprep.subr.bf16.mxu0 0
    %158 = vmatpush2.bf16.msra.mxu0 0
    %159 = vmatprep.subr.bf16.mxu0 0
    %160 = vmatpush2.bf16.msra.mxu0 0
    %161 = vmatprep.subr.bf16.mxu0 0
    %162 = vmatpush2.bf16.msra.mxu0 0
    %163 = vmatprep.subr.bf16.mxu0 0
    %164 = vmatpush2.bf16.msra.mxu0 0
    %165 = vmatprep.subr.bf16.mxu0 0
    %166 = vmatpush2.bf16.msra.mxu0 0
    %167 = vmatprep.subr.bf16.mxu0 0
    %168 = vmatpush2.bf16.msra.mxu0 0
    %169 = vmatprep.mubr.bf16.mxu0 0
    %170 = vmatmul.mubr.bf16.gmra.mxu0 %v135
    %v171 = vpop.f32.mrf.mxu0
    %v172 = vadd.f32 0.0, %v171
    %v173 = vpop.f32.mrf.mxu0
    %v174 = vpop.f32.mrf.mxu0
    %v175 = vpop.f32.mrf.mxu0
    %176 = vdwg.mxu0
    %v181 = vunpack.c.l.b16 %v104
    %v182 = vunpack.c.l.b16 %v105
    %v183 = vunpack.c.l.b16 %v106
    %v184 = vunpack.c.l.b16 %v107
    %v185 = vpack.c.b16 %v182, %v181
    %v186 = vpack.c.b16 %v184, %v183
    %v190 = vsel %vm133, %v118, 0
    %192 = vmatprep.subr.bf16.mxu0 0
    %193 = vmatpush1.bf16.msra.mxu0 0
    %194 = vmatprep.subr.bf16.mxu0 0
    %195 = vmatpush1.bf16.msra.mxu0 0
    %196 = vmatprep.subr.bf16.mxu0 0
    %197 = vmatpush1.bf16.msra.mxu0 0
    %198 = vmatprep.subr.bf16.mxu0 0
    %199 = vmatpush1.bf16.msra.mxu0 0
    %200 = vmatprep.subr.bf16.mxu0 0
    %201 = vmatpush1.bf16.msra.mxu0 0
    %202 = vmatprep.subr.bf16.mxu0 0
    %203 = vmatpush1.bf16.msra.mxu0 0
    %204 = vmatprep.subr.bf16.mxu0 0
    %205 = vmatpush1.bf16.msra.mxu0 %v186
    %206 = vmatprep.subr.bf16.mxu0 0
    %207 = vmatpush1.bf16.msra.mxu0 %v185
    %208 = vmatprep.subr.bf16.mxu0 0
    %209 = vmatpush2.bf16.msra.mxu0 0
    %210 = vmatprep.subr.bf16.mxu0 0
    %211 = vmatpush2.bf16.msra.mxu0 0
    %212 = vmatprep.subr.bf16.mxu0 0
    %213 = vmatpush2.bf16.msra.mxu0 0
    %214 = vmatprep.subr.bf16.mxu0 0
    %215 = vmatpush2.bf16.msra.mxu0 0
    %216 = vmatprep.subr.bf16.mxu0 0
    %217 = vmatpush2.bf16.msra.mxu0 0
    %218 = vmatprep.subr.bf16.mxu0 0
    %219 = vmatpush2.bf16.msra.mxu0 0
    %220 = vmatprep.subr.bf16.mxu0 0
    %221 = vmatpush2.bf16.msra.mxu0 0
    %222 = vmatprep.subr.bf16.mxu0 0
    %223 = vmatpush2.bf16.msra.mxu0 0
    %224 = vmatprep.mubr.bf16.mxu0 0
    %225 = vmatmul.mubr.bf16.gmra.mxu0 %v190
    %v226 = vpop.f32.mrf.mxu0
    %v227 = vadd.f32 %v172, %v226
    %v228 = vpop.f32.mrf.mxu0
    %v229 = vpop.f32.mrf.mxu0
    %v230 = vpop.f32.mrf.mxu0
    %231 = vdwg.mxu0
    %v232 = vld [vmem:[#allocation7] sm:$0xff]
    %v233 = vpack.c.bf16 %v232, %v232
    %v238 = vunpack.c.l.b16 %v112
    %v239 = vunpack.c.l.b16 %v113
    %v240 = vunpack.c.l.b16 %v114
    %v241 = vunpack.c.l.b16 %v115
    %v242 = vpack.c.b16 %v239, %v238
    %v243 = vpack.c.b16 %v241, %v240
    %v247 = vsel %vm133, %v233, 0
    %249 = vmatprep.subr.bf16.mxu0 0
    %250 = vmatpush1.bf16.msra.mxu0 0
    %251 = vmatprep.subr.bf16.mxu0 0
    %252 = vmatpush1.bf16.msra.mxu0 0
    %253 = vmatprep.subr.bf16.mxu0 0
    %254 = vmatpush1.bf16.msra.mxu0 0
    %255 = vmatprep.subr.bf16.mxu0 0
    %256 = vmatpush1.bf16.msra.mxu0 0
    %257 = vmatprep.subr.bf16.mxu0 0
    %258 = vmatpush1.bf16.msra.mxu0 0
    %259 = vmatprep.subr.bf16.mxu0 0
    %260 = vmatpush1.bf16.msra.mxu0 0
    %261 = vmatprep.subr.bf16.mxu0 0
    %262 = vmatpush1.bf16.msra.mxu0 %v243
    %263 = vmatprep.subr.bf16.mxu0 0
    %264 = vmatpush1.bf16.msra.mxu0 %v242
    %265 = vmatprep.subr.bf16.mxu0 0
    %266 = vmatpush2.bf16.msra.mxu0 0
    %267 = vmatprep.subr.bf16.mxu0 0
    %268 = vmatpush2.bf16.msra.mxu0 0
    %269 = vmatprep.subr.bf16.mxu0 0
    %270 = vmatpush2.bf16.msra.mxu0 0
    %271 = vmatprep.subr.bf16.mxu0 0
    %272 = vmatpush2.bf16.msra.mxu0 0
    %273 = vmatprep.subr.bf16.mxu0 0
    %274 = vmatpush2.bf16.msra.mxu0 0
    %275 = vmatprep.subr.bf16.mxu0 0
    %276 = vmatpush2.bf16.msra.mxu0 0
    %277 = vmatprep.subr.bf16.mxu0 0
    %278 = vmatpush2.bf16.msra.mxu0 0
    %279 = vmatprep.subr.bf16.mxu0 0
    %280 = vmatpush2.bf16.msra.mxu0 0
    %281 = vmatprep.mubr.bf16.mxu0 0
    %282 = vmatmul.mubr.bf16.gmra.mxu0 %v247
    %v283 = vpop.f32.mrf.mxu0
    %v284 = vadd.f32 0.0, %v283
    %v285 = vpop.f32.mrf.mxu0
    %v286 = vpop.f32.mrf.mxu0
    %v287 = vpop.f32.mrf.mxu0
    %288 = vdwg.mxu0
    %v289 = vadd.f32 %v227, %v284
    %v291 = vlaneseq
    %v292 = vshrl.u32 %v291, 7
    %v293 = vsub.s32 0, %v292
    %v294 = vrot.slane %v116, %v293
    %v296 = vadd.f32 %v289, %v294
    %v297 = vpack.c.bf16 %v296, %v296
    %vm298 = vcmask 519168
    %299 = vst.msk [vmem:[#allocation13] sm:$0xf] %vm298, %v297
    %v300 = vld [vmem:[#allocation2] sm:$0xff]
    %v301 = vpack.c.bf16 %v300, %v300
    %v302 = vld [vmem:[#allocation5] sm:$0xff]
    %v303 = vpack.c.bf16 %v302, %v302
    %305 = vrot.lane.b32.xlu0 %v303, 96
    %v306 = vpop.permute.xlu0 %305
    %v308 = vsel %vm133, %v306, 0
    %310 = vmatprep.subr.bf16.mxu0 0
    %311 = vmatpush1.bf16.msra.mxu0 0
    %312 = vmatprep.subr.bf16.mxu0 0
    %313 = vmatpush1.bf16.msra.mxu0 0
    %314 = vmatprep.subr.bf16.mxu0 0
    %315 = vmatpush1.bf16.msra.mxu0 0
    %316 = vmatprep.subr.bf16.mxu0 0
    %317 = vmatpush1.bf16.msra.mxu0 0
    %318 = vmatprep.subr.bf16.mxu0 0
    %319 = vmatpush1.bf16.msra.mxu0 0
    %320 = vmatprep.subr.bf16.mxu0 0
    %321 = vmatpush1.bf16.msra.mxu0 0
    %322 = vmatprep.subr.bf16.mxu0 0
    %323 = vmatpush1.bf16.msra.mxu0 %v130
    %324 = vmatprep.subr.bf16.mxu0 0
    %325 = vmatpush1.bf16.msra.mxu0 %v129
    %326 = vmatprep.subr.bf16.mxu0 0
    %327 = vmatpush2.bf16.msra.mxu0 0
    %328 = vmatprep.subr.bf16.mxu0 0
    %329 = vmatpush2.bf16.msra.mxu0 0
    %330 = vmatprep.subr.bf16.mxu0 0
    %331 = vmatpush2.bf16.msra.mxu0 0
    %332 = vmatprep.subr.bf16.mxu0 0
    %333 = vmatpush2.bf16.msra.mxu0 0
    %334 = vmatprep.subr.bf16.mxu0 0
    %335 = vmatpush2.bf16.msra.mxu0 0
    %336 = vmatprep.subr.bf16.mxu0 0
    %337 = vmatpush2.bf16.msra.mxu0 0
    %338 = vmatprep.subr.bf16.mxu0 0
    %339 = vmatpush2.bf16.msra.mxu0 0
    %340 = vmatprep.subr.bf16.mxu0 0
    %341 = vmatpush2.bf16.msra.mxu0 0
    %342 = vmatprep.mubr.bf16.mxu0 0
    %343 = vmatmul.mubr.bf16.gmra.mxu0 %v308
    %v344 = vpop.f32.mrf.mxu0
    %v345 = vadd.f32 0.0, %v344
    %v346 = vpop.f32.mrf.mxu0
    %v347 = vpop.f32.mrf.mxu0
    %v348 = vpop.f32.mrf.mxu0
    %349 = vdwg.mxu0
    %351 = vrot.lane.b32.xlu0 %v301, 96
    %v352 = vpop.permute.xlu0 %351
    %v354 = vsel %vm133, %v352, 0
    %356 = vmatprep.subr.bf16.mxu0 0
    %357 = vmatpush1.bf16.msra.mxu0 0
    %358 = vmatprep.subr.bf16.mxu0 0
    %359 = vmatpush1.bf16.msra.mxu0 0
    %360 = vmatprep.subr.bf16.mxu0 0
    %361 = vmatpush1.bf16.msra.mxu0 0
    %362 = vmatprep.subr.bf16.mxu0 0
    %363 = vmatpush1.bf16.msra.mxu0 0
    %364 = vmatprep.subr.bf16.mxu0 0
    %365 = vmatpush1.bf16.msra.mxu0 0
    %366 = vmatprep.subr.bf16.mxu0 0
    %367 = vmatpush1.bf16.msra.mxu0 0
    %368 = vmatprep.subr.bf16.mxu0 0
    %369 = vmatpush1.bf16.msra.mxu0 %v186
    %370 = vmatprep.subr.bf16.mxu0 0
    %371 = vmatpush1.bf16.msra.mxu0 %v185
    %372 = vmatprep.subr.bf16.mxu0 0
    %373 = vmatpush2.bf16.msra.mxu0 0
    %374 = vmatprep.subr.bf16.mxu0 0
    %375 = vmatpush2.bf16.msra.mxu0 0
    %376 = vmatprep.subr.bf16.mxu0 0
    %377 = vmatpush2.bf16.msra.mxu0 0
    %378 = vmatprep.subr.bf16.mxu0 0
    %379 = vmatpush2.bf16.msra.mxu0 0
    %380 = vmatprep.subr.bf16.mxu0 0
    %381 = vmatpush2.bf16.msra.mxu0 0
    %382 = vmatprep.subr.bf16.mxu0 0
    %383 = vmatpush2.bf16.msra.mxu0 0
    %384 = vmatprep.subr.bf16.mxu0 0
    %385 = vmatpush2.bf16.msra.mxu0 0
    %386 = vmatprep.subr.bf16.mxu0 0
    %387 = vmatpush2.bf16.msra.mxu0 0
    %388 = vmatprep.mubr.bf16.mxu0 0
    %389 = vmatmul.mubr.bf16.gmra.mxu0 %v354
    %v390 = vpop.f32.mrf.mxu0
    %v391 = vadd.f32 %v345, %v390
    %v392 = vpop.f32.mrf.mxu0
    %v393 = vpop.f32.mrf.mxu0
    %v394 = vpop.f32.mrf.mxu0
    %395 = vdwg.mxu0
    %v396 = vld [vmem:[#allocation7] sm:$0xff]
    %v397 = vpack.c.bf16 %v396, %v396
    %399 = vrot.lane.b32.xlu0 %v397, 96
    %v400 = vpop.permute.xlu0 %399
    %v402 = vsel %vm133, %v400, 0
    %404 = vmatprep.subr.bf16.mxu0 0
    %405 = vmatpush1.bf16.msra.mxu0 0
    %406 = vmatprep.subr.bf16.mxu0 0
    %407 = vmatpush1.bf16.msra.mxu0 0
    %408 = vmatprep.subr.bf16.mxu0 0
    %409 = vmatpush1.bf16.msra.mxu0 0
    %410 = vmatprep.subr.bf16.mxu0 0
    %411 = vmatpush1.bf16.msra.mxu0 0
    %412 = vmatprep.subr.bf16.mxu0 0
    %413 = vmatpush1.bf16.msra.mxu0 0
    %414 = vmatprep.subr.bf16.mxu0 0
    %415 = vmatpush1.bf16.msra.mxu0 0
    %416 = vmatprep.subr.bf16.mxu0 0
    %417 = vmatpush1.bf16.msra.mxu0 %v243
    %418 = vmatprep.subr.bf16.mxu0 0
    %419 = vmatpush1.bf16.msra.mxu0 %v242
    %420 = vmatprep.subr.bf16.mxu0 0
    %421 = vmatpush2.bf16.msra.mxu0 0
    %422 = vmatprep.subr.bf16.mxu0 0
    %423 = vmatpush2.bf16.msra.mxu0 0
    %424 = vmatprep.subr.bf16.mxu0 0
    %425 = vmatpush2.bf16.msra.mxu0 0
    %426 = vmatprep.subr.bf16.mxu0 0
    %427 = vmatpush2.bf16.msra.mxu0 0
    %428 = vmatprep.subr.bf16.mxu0 0
    %429 = vmatpush2.bf16.msra.mxu0 0
    %430 = vmatprep.subr.bf16.mxu0 0
    %431 = vmatpush2.bf16.msra.mxu0 0
    %432 = vmatprep.subr.bf16.mxu0 0
    %433 = vmatpush2.bf16.msra.mxu0 0
    %434 = vmatprep.subr.bf16.mxu0 0
    %435 = vmatpush2.bf16.msra.mxu0 0
    %436 = vmatprep.mubr.bf16.mxu0 0
    %437 = vmatmul.mubr.bf16.gmra.mxu0 %v402
    %v438 = vpop.f32.mrf.mxu0
    %v439 = vadd.f32 0.0, %v438
    %v440 = vpop.f32.mrf.mxu0
    %v441 = vpop.f32.mrf.mxu0
    %v442 = vpop.f32.mrf.mxu0
    %443 = vdwg.mxu0
    %v444 = vadd.f32 %v391, %v439
    %v445 = vadd.f32 %v444, %v294
    %v446 = vpack.c.bf16 %v445, %v445
    %s447 = scalar_lea.vmem [#allocation13], 4
    %448 = vst.msk [vmem:[%s447] sm:$0xf] %vm298, %v446
    // Predicated region
    $region54: #{tpu_custom_call.1} parent=1 // pred_check
      _
    $region55: #{tpu_custom_call.1} parent=1 // pred_check_branch
      %450 = sbr.rel (0) target = $region57
    $region56: #{tpu_custom_call.1} parent=1 // pred_region
      %s452 = ssub.s32 128, 128
      %453 = vsyncadd [#allocation4], %s452
      %s454 = sshll.u32 [#allocation13], 4
      %s455 = int_to_ptr.vmem [resolvable:$true] %s454
      %460 = dma.vmem_to_hbm [thread:$0]  %s455, 128, %s7, [#allocation4], 64, 64, 4
    $region57: #{tpu_custom_call.1} parent=1 // pred_fallthru
      _
    // Predicated region
    $region58: #{tpu_custom_call.1} parent=1 // pred_check
      _
    $region59: #{tpu_custom_call.1} parent=1 // pred_check_branch
      %462 = sbr.rel (0) target = $region61
    $region60: #{tpu_custom_call.1} parent=1 // pred_region
      %463 = dma.done [#allocation4], 128
    $region61: #{tpu_custom_call.1} parent=1 // pred_fallthru
      _
    %464 = vsyncpa [#allocation3], 1
    %465 = vsyncpa [#allocation6], 1
    %466 = vsyncpa [#allocation9], 1
    %467 = vsyncpa [#allocation12], 1
    %468 = vsyncpa [#allocation4], 1

</llo_original>
